<compile_context>
chip_gen: v7x
topology: tpu7x:2x2x1
jax: 0.10.0
libtpu: 0.0.40
codegen_flags: <defaults>
</compile_context>

<pallas_src>
import jax
import jax.numpy as jnp
from jax import lax
from jax.experimental import pallas as pl
from jax.experimental.pallas import tpu as pltpu

BN_EPS = 1e-5
_LANE = 128
_ROW_ALIGN = 16                       # bf16 sublane packing
_MAX_ROW_TILE = 1024
_MAX_COL_TILE = 1024
_ACT_VMEM_BUDGET = 24 << 20           # budget for double-buffered activation tiles
_SINGLE_BUFFER_MIN_BYTES = 2 << 20    # only single-buffer the weight when it is big


def _round_up(x: int, m: int) -> int:
    return (x + m - 1) // m * m


def _maybe_single_buffered(block_shape, index_map, nbytes):
    """BlockSpec for a block whose index is constant across the whole grid.

    For large blocks, request a single VMEM buffer (no double-buffering) when the
    running JAX supports pipeline_mode; otherwise fall back to the default spec.
    Small blocks always use the default spec (risk-free path)."""
    if nbytes >= _SINGLE_BUFFER_MIN_BYTES:
        try:
            return pl.BlockSpec(block_shape, index_map, pipeline_mode=pl.Buffered(1))
        except (TypeError, AttributeError):
            pass
    return pl.BlockSpec(block_shape, index_map)


def _make_kernel(apply_bn: bool, want_stats: bool, need_row_mask: bool,
                 tm: int, n_true: int):
    """One linear layer tile: [fused BN-affine + ReLU] -> bf16 matmul (f32 acc) ->
    bf16 activation store [+ per-tile f32 sum / sumsq stats]."""

    def kernel(*refs):
        if apply_bn:
            h_ref, scale_ref, shift_ref, w_ref = refs[:4]
            out_refs = refs[4:]
        else:
            h_ref, w_ref = refs[:2]
            out_refs = refs[2:]
        y_ref = out_refs[0]

        h = h_ref[...]                                       # (tm, c_in_pad) bf16
        if apply_bn:
            # Fused BN normalize+affine (precomputed scale/shift) + ReLU in f32.
            hf = h.astype(jnp.float32) * scale_ref[...] + shift_ref[...]
            hf = jnp.maximum(hf, 0.0)
            if need_row_mask:
                # Padded rows exist only in the last row tile; keep them exactly
                # zero so this layer's batch statistics stay exact.  Cheap VPU
                # work, hidden under the DMA of this mem-bound kernel.
                row0 = pl.program_id(0) * tm
                rows = row0 + lax.broadcasted_iota(jnp.int32, (tm, 1), 0)
                hf = jnp.where(rows < n_true, hf, 0.0)
            h = hf.astype(jnp.bfloat16)

        # bf16 MXU inputs, f32 accumulation.
        y = jnp.dot(h, w_ref[...], preferred_element_type=jnp.float32)  # (tm, tn) f32
        y_ref[...] = y.astype(jnp.bfloat16)                  # bf16 inter-layer slab

        if want_stats:
            stats_ref = out_refs[1]
            # Stats from the f32 accumulator (not the rounded bf16 store).
            # Direct row stores: no concatenate/reshape cross-sublane relayout.
            stats_ref[0, 0:1, :] = jnp.sum(y, axis=0, keepdims=True)
            stats_ref[0, 1:2, :] = jnp.sum(y * y, axis=0, keepdims=True)

    return kernel


def _linear_layer(h, w_t_bf16, scale, shift, *, n_true, tm, want_stats):
    """Run one padded linear layer over (row, c_out) tiles.

    h         : (n_pad, c_in_pad) bf16 activation slab (padded rows/channels are 0).
    w_t_bf16  : (c_in_pad, c_out_pad) bf16 pre-transposed, zero-padded weight.
    scale/shift : (1, c_in_pad) f32 fused-BN vectors for the *input* channels, or None.
    Returns (y, stats): y (n_pad, c_out_pad) bf16; stats (n_row_tiles, 2, c_out_pad)
    f32 or None.
    """
    n_pad, c_in_p = h.shape
    c_out_p = w_t_bf16.shape[1]
    n_row_tiles = n_pad // tm
    tn = min(c_out_p, _MAX_COL_TILE)
    n_col_tiles = c_out_p // tn

    apply_bn = scale is not None
    # The row mask only matters when this layer's output feeds batch statistics.
    need_row_mask = apply_bn and want_stats and (n_pad > n_true)

    kernel = _make_kernel(apply_bn, want_stats, need_row_mask, tm, n_true)

    # Weight spec: tiled over c_out; single-buffered when constant across the grid.
    w_bytes = c_in_p * c_out_p * 2
    if n_col_tiles == 1:
        w_spec = _maybe_single_buffered((c_in_p, tn), lambda i, j: (0, 0), w_bytes)
    else:
        w_spec = pl.BlockSpec((c_in_p, tn), lambda i, j: (0, j))

    in_specs = [pl.BlockSpec((tm, c_in_p), lambda i, j: (i, 0))]
    inputs = [h]
    if apply_bn:
        bn_spec = pl.BlockSpec((1, c_in_p), lambda i, j: (0, 0))
        in_specs += [bn_spec, bn_spec]
        inputs += [scale, shift]
    in_specs.append(w_spec)
    inputs.append(w_t_bf16)

    out_shapes = [jax.ShapeDtypeStruct((n_pad, c_out_p), jnp.bfloat16)]
    out_specs = [pl.BlockSpec((tm, tn), lambda i, j: (i, j))]
    if want_stats:
        out_shapes.append(jax.ShapeDtypeStruct((n_row_tiles, 2, c_out_p), jnp.float32))
        out_specs.append(pl.BlockSpec((1, 2, tn), lambda i, j: (i, 0, j)))

    # Explicit scoped-VMEM budget (v5e default is only 16 MiB): double-buffered
    # bf16 activation tiles + weight tile + BN vectors + stats, with slack.
    vmem_need = (2 * tm * c_in_p * 2 + 2 * tm * tn * 2
                 + (2 if n_col_tiles > 1 else 1) * c_in_p * tn * 2
                 + (2 * 2 * c_in_p * 4 if apply_bn else 0)
                 + (2 * 2 * tn * 4 if want_stats else 0))
    vmem_limit = min(max(int(1.5 * vmem_need) + (2 << 20), 32 << 20), 100 << 20)

    cost = pl.CostEstimate(
        flops=2 * n_pad * c_in_p * c_out_p,
        transcendentals=0,
        bytes_accessed=(n_pad * c_in_p * 2 + c_in_p * c_out_p * 2
                        + n_pad * c_out_p * 2),
    )

    out = pl.pallas_call(
        kernel,
        out_shape=tuple(out_shapes),
        grid_spec=pltpu.PrefetchScalarGridSpec(
            num_scalar_prefetch=0,
            grid=(n_row_tiles, n_col_tiles),
            in_specs=in_specs,
            out_specs=tuple(out_specs),
        ),
        compiler_params=pltpu.CompilerParams(
            # Every grid step writes disjoint output blocks (stats are per-tile
            # partials), so both axes are safe to shard across TensorCores.
            dimension_semantics=("parallel", "parallel"),
            vmem_limit_bytes=vmem_limit,
        ),
        cost_estimate=cost,
    )(*inputs)

    if want_stats:
        return out[0], out[1]
    return out[0], None


def prepare_params(params):
    """One-time weight preprocessing: transpose, pad channel dims to multiples of
    128, cast to bf16, pad BN affine params.  Keeps the per-forward path free of
    weight-side HBM rewrites (~3x weight traffic saved per call)."""
    hidden = []
    for (w, _bias, gamma, beta) in params["hidden"]:
        d_out, d_in = w.shape
        d_in_p = _round_up(d_in, _LANE)
        d_out_p = _round_up(d_out, _LANE)
        # NOTE: the hidden Linear bias is intentionally dropped: BatchNorm's mean
        # subtraction cancels it exactly in the normalized output.
        w_t = jnp.pad(w.T.astype(jnp.float32),
                      ((0, d_in_p - d_in), (0, d_out_p - d_out))).astype(jnp.bfloat16)
        g = jnp.pad(gamma.astype(jnp.float32), (0, d_out_p - d_out))
        be = jnp.pad(beta.astype(jnp.float32), (0, d_out_p - d_out))
        hidden.append({"w_t": w_t, "gamma": g, "beta": be})

    w_out = params["w_out"]
    d_out, d_in = w_out.shape
    d_in_p = _round_up(d_in, _LANE)
    d_out_p = _round_up(d_out, _LANE)
    w_out_t = jnp.pad(w_out.T.astype(jnp.float32),
                      ((0, d_in_p - d_in), (0, d_out_p - d_out))).astype(jnp.bfloat16)
    return {"hidden": hidden, "w_out_t": w_out_t}


def _pick_row_tile(n: int, c_max_pad: int) -> int:
    """Row tile: multiple of 16 (bf16 packing), >=2 grid steps when possible (v7x
    megacore), capped so double-buffered bf16 in+out tiles stay within budget."""
    tm = min(_MAX_ROW_TILE, _round_up(-(-n // 2), _ROW_ALIGN))
    tn = min(c_max_pad, _MAX_COL_TILE)
    while tm > _ROW_ALIGN and 2 * 2 * tm * (c_max_pad + tn) > _ACT_VMEM_BUDGET:
        tm = max(_ROW_ALIGN, _round_up(tm // 2, _ROW_ALIGN))
    return tm


def alise_proj_forward(x, prepared, out_channels: int):
    """AliseProj forward: x (b, t, c_in) -> (b, t, out_channels)."""
    b, t, c_in = x.shape
    n = b * t

    c_in_pad = _round_up(c_in, _LANE)
    c_dims = ([c_in_pad] + [lyr["w_t"].shape[1] for lyr in prepared["hidden"]]
              + [prepared["w_out_t"].shape[1]])
    tm = _pick_row_tile(n, max(c_dims))
    n_pad = _round_up(n, tm)

    # bf16 activation slab; padded rows/cols stay exactly zero.
    h = jnp.pad(x.reshape(n, c_in).astype(jnp.bfloat16),
                ((0, n_pad - n), (0, c_in_pad - c_in)))

    scale = shift = None
    for layer in prepared["hidden"]:
        y, stats = _linear_layer(h, layer["w_t"], scale, shift,
                                 n_true=n, tm=tm, want_stats=True)

        # Tiny cross-tile reduction + BN parameter math in f32 (XLA).
        sums = jnp.sum(stats, axis=0)                    # (2, d_out_pad)
        mu = sums[0] / n
        # TODO(synk): single-pass E[x^2]-E[x]^2 variance in f32; adequate for a
        # projector head, switch to Chan's parallel combine for very large N.
        var = jnp.maximum(sums[1] / n - mu * mu, 0.0)    # biased variance (train mode)
        inv = lax.rsqrt(var + BN_EPS)
        scale = (layer["gamma"] * inv).reshape(1, -1)
        shift = (layer["beta"] - mu * layer["gamma"] * inv).reshape(1, -1)
        h = y

    # Final Linear (bias=False), with the previous block's fused BN+ReLU (if any).
    y, _ = _linear_layer(h, prepared["w_out_t"], scale, shift,
                         n_true=n, tm=tm, want_stats=False)

    return y[:n, :out_channels].reshape(b, t, out_channels).astype(x.dtype)


def init_params(key, input_channels: int, out_channels: int, l_dim):
    """Synthetic parameters matching AliseProj.__init__ shapes (PyTorch layout)."""
    dims = [input_channels] + (list(l_dim) if l_dim is not None else []) + [out_channels]
    hidden = []
    for i in range(len(dims) - 2):
        key, kw, kb, kg, kbe = jax.random.split(key, 5)
        d_in, d_out = dims[i], dims[i + 1]
        w = jax.random.normal(kw, (d_out, d_in), jnp.float32) * 0.05
        bias = jax.random.normal(kb, (d_out,), jnp.float32) * 0.05
        gamma = 1.0 + 0.1 * jax.random.normal(kg, (d_out,), jnp.float32)
        beta = 0.1 * jax.random.normal(kbe, (d_out,), jnp.float32)
        hidden.append((w, bias, gamma, beta))
    key, kw = jax.random.split(key)
    w_out = jax.random.normal(kw, (dims[-1], dims[-2]), jnp.float32) * 0.05
    return {"hidden": hidden, "w_out": w_out}


def _reference(x, params):
    """Pure-JAX f32 reference with PyTorch semantics (bias included, two-pass BN)."""
    b, t, c = x.shape
    h = x.reshape(b * t, c).astype(jnp.float32)
    for (w, bias, gamma, beta) in params["hidden"]:
        h = h @ w.T + bias
        mu = jnp.mean(h, axis=0, keepdims=True)
        var = jnp.mean((h - mu) ** 2, axis=0, keepdims=True)
        h = (h - mu) * lax.rsqrt(var + BN_EPS)
        h = h * gamma + beta
        h = jnp.maximum(h, 0.0)
    h = h @ params["w_out"].T
    return h.reshape(b, t, -1).astype(x.dtype)


if __name__ == "__main__":
    # n = b*t = 14 rows -> exercises the padded-row masking path;
    # two hidden blocks -> exercises chained BN stats; channels 16/32/24/8 pad to 128.
    B, T = 2, 7
    INPUT_CHANNELS = 16
    OUT_CHANNELS = 8
    L_DIM = [32, 24]

    key = jax.random.PRNGKey(0)
    key, kx = jax.random.split(key)
    x = jax.random.normal(kx, (B, T, INPUT_CHANNELS), jnp.float32)

    params = init_params(key, INPUT_CHANNELS, OUT_CHANNELS, L_DIM)
    prepared = prepare_params(params)
    out = jax.block_until_ready(alise_proj_forward(x, prepared, OUT_CHANNELS))
    ref = _reference(x, params)
    assert out.shape == (B, T, OUT_CHANNELS), out.shape
    err = float(jnp.max(jnp.abs(out - ref)))
    assert err < 5e-2, err  # bf16 MXU inputs + bf16 activation storage vs f32 ref

    # l_dim=None configuration: a single bias-free Linear, no BN.
    params2 = init_params(jax.random.PRNGKey(1), INPUT_CHANNELS, OUT_CHANNELS, None)
    prepared2 = prepare_params(params2)
    out2 = jax.block_until_ready(alise_proj_forward(x, prepared2, OUT_CHANNELS))
    ref2 = _reference(x, params2)
    assert out2.shape == (B, T, OUT_CHANNELS), out2.shape
    err2 = float(jnp.max(jnp.abs(out2 - ref2)))
    assert err2 < 5e-2, err2

    print("KERNEL_OK")
</pallas_src>

<mosaic_0001>
module attributes {stable_mosaic.version = 11 : i64} {
  func.func @kernel(%arg0: i32, %arg1: i32, %arg2: memref<16x128xbf16, #tpu.memory_space<vmem>>, %arg3: memref<128x128xbf16, #tpu.memory_space<vmem>>, %arg4: memref<16x128xbf16, #tpu.memory_space<vmem>>, %arg5: memref<1x2x128xf32, #tpu.memory_space<vmem>>) attributes {dimension_semantics = [#tpu.dimension_semantics<parallel>, #tpu.dimension_semantics<parallel>], iteration_bounds = array<i64: 1, 1>, scalar_prefetch = 0 : i64, scratch_operands = 0 : i64, tpu.core_type = #tpu.core_type<tc>, window_params = [{transform_indices = @transform_0, window_bounds = array<i64: 16, 128>}, {pipeline_mode = #tpu.pipeline_mode<synchronous>, transform_indices = @transform_1, window_bounds = array<i64: 128, 128>}, {transform_indices = @transform_2, window_bounds = array<i64: 16, 128>}, {transform_indices = @transform_3, window_bounds = array<i64: 1, 2, 128>}]} {
    %c0 = arith.constant 0 : index
    %c0_0 = arith.constant 0 : index
    %0 = vector.load %arg2[%c0, %c0_0] : memref<16x128xbf16, #tpu.memory_space<vmem>>, vector<16x128xbf16>
    %c0_1 = arith.constant 0 : index
    %c0_2 = arith.constant 0 : index
    %1 = vector.load %arg3[%c0_1, %c0_2] : memref<128x128xbf16, #tpu.memory_space<vmem>>, vector<128x128xbf16>
    %cst = arith.constant dense<0.000000e+00> : vector<16x128xf32>
    %2 = tpu.matmul %0, %1, %cst {dimension_numbers = #tpu.dot_dimension_numbers<[1], [0], [0], [1], [0, 0, 1, 1], [], []>} : vector<16x128xbf16>, vector<128x128xbf16>, vector<16x128xf32> -> vector<16x128xf32>
    %3 = arith.truncf %2 : vector<16x128xf32> to vector<16x128xbf16>
    %c0_3 = arith.constant 0 : index
    %c0_4 = arith.constant 0 : index
    %4 = vector.load %arg4[%c0_3, %c0_4] : memref<16x128xbf16, #tpu.memory_space<vmem>>, vector<16x128xbf16>
    tpu.vector_store %arg4[%c0_3, %c0_4], %3 {strides = array<i32>} : memref<16x128xbf16, #tpu.memory_space<vmem>>, vector<16x128xbf16>,
    %cst_5 = arith.constant dense<0.000000e+00> : vector<128xf32>
    %5 = vector.multi_reduction <add>, %2, %cst_5 [0] : vector<16x128xf32> to vector<128xf32>
    %6 = vector.shape_cast %5 : vector<128xf32> to vector<1x128xf32>
    %c0_6 = arith.constant 0 : index
    %c0_7 = arith.constant 0 : index
    %c0_8 = arith.constant 0 : index
    %7 = vector.load %arg5[%c0_6, %c0_7, %c0_8] : memref<1x2x128xf32, #tpu.memory_space<vmem>>, vector<1x1x128xf32>
    %8 = vector.shape_cast %7 : vector<1x1x128xf32> to vector<1x128xf32>
    %9 = vector.shape_cast %6 : vector<1x128xf32> to vector<1x1x128xf32>
    tpu.vector_store %arg5[%c0_6, %c0_7, %c0_8], %9 {strides = array<i32>} : memref<1x2x128xf32, #tpu.memory_space<vmem>>, vector<1x1x128xf32>,
    %10 = arith.mulf %2, %2 : vector<16x128xf32>
    %cst_9 = arith.constant dense<0.000000e+00> : vector<128xf32>
    %11 = vector.multi_reduction <add>, %10, %cst_9 [0] : vector<16x128xf32> to vector<128xf32>
    %12 = vector.shape_cast %11 : vector<128xf32> to vector<1x128xf32>
    %c0_10 = arith.constant 0 : index
    %c1 = arith.constant 1 : index
    %c0_11 = arith.constant 0 : index
    %13 = vector.load %arg5[%c0_10, %c1, %c0_11] : memref<1x2x128xf32, #tpu.memory_space<vmem>>, vector<1x1x128xf32>
    %14 = vector.shape_cast %13 : vector<1x1x128xf32> to vector<1x128xf32>
    %15 = vector.shape_cast %12 : vector<1x128xf32> to vector<1x1x128xf32>
    tpu.vector_store %arg5[%c0_10, %c1, %c0_11], %15 {strides = array<i32>} : memref<1x2x128xf32, #tpu.memory_space<vmem>>, vector<1x1x128xf32>,
    return
  }
  func.func @transform_0(%arg0: i32, %arg1: i32) -> (i32, i32) {
    %c0_i32 = arith.constant 0 : i32
    %c0_i32_0 = arith.constant 0 : i32
    return %arg0, %c0_i32 : i32, i32
  }
  func.func @transform_1(%arg0: i32, %arg1: i32) -> (i32, i32) {
    %c0_i32 = arith.constant 0 : i32
    %c0_i32_0 = arith.constant 0 : i32
    %c0_i32_1 = arith.constant 0 : i32
    return %c0_i32, %c0_i32_0 : i32, i32
  }
  func.func @transform_2(%arg0: i32, %arg1: i32) -> (i32, i32) {
    %c0_i32 = arith.constant 0 : i32
    return %arg0, %arg1 : i32, i32
  }
  func.func @transform_3(%arg0: i32, %arg1: i32) -> (i32, i32, i32) {
    %c0_i32 = arith.constant 0 : i32
    %c0_i32_0 = arith.constant 0 : i32
    return %arg0, %c0_i32, %arg1 : i32, i32, i32
  }
}

</mosaic_0001>

<llo_original>
// kernel: tpu_custom_call.1
$region0: #{tpu_custom_call.1}
  #allocation0 [shape = 'u32[]', space=smem, size = 0x4, offset = 0x4, fixed_abs, tag = 'smem constant byte address 0x4 - core index']
  #allocation1 [shape = 'u32[144,128]{1,0:T(1,128)}', space=vmem, size = 0x12000, scoped, tag = 'internal scratch']
  %s0 = inlined_call_operand.hbm [shape: bf16[16,128], index: 0, kind: input, shape index: {}]
  %s1 = inlined_call_operand.hbm [shape: bf16[128,128], index: 1, kind: input, shape index: {}]
  %s2 = inlined_call_operand.hbm [shape: bf16[16,128], index: 2, kind: output, shape index: {0}]
  %s3 = inlined_call_operand.hbm [shape: f32[1,2,128], index: 3, kind: output, shape index: {1}]
  %4 = xla_tuple %s2, %s3
  %s5 = sld [smem:[#allocation0]]
  $region34: #{tpu_custom_call.1} parent=0
    _
  %s7 = ssub.s32 1, %s5
  %s8 = scalar_select 0, %s7, %s5
  $region1: #{tpu_custom_call.1} parent=0
    #allocation2 [shape = 'u8[4096]{0}', space=vmem, size = 0x1000, scoped, tag = 'input window, operand 0, single buffered']
    #allocation3 [shape = 's32[1]{0}', space=sflag, size = 0x4, scoped, tag = 'scoped memory for tpu_custom_call.1']
    #allocation4 [shape = 's32[1]{0}', space=sflag, size = 0x4, scoped, tag = 'scoped memory for tpu_custom_call.1']
    #allocation5 [shape = 'u8[32768]{0}', space=vmem, size = 0x8000, scoped, tag = 'input window, operand 1, single buffered']
    #allocation6 [shape = 's32[1]{0}', space=sflag, size = 0x4, scoped, tag = 'scoped memory for tpu_custom_call.1']
    #allocation7 [shape = 'u8[4096]{0}', space=vmem, size = 0x1000, scoped, tag = 'output window, operand 0, single buffered']
    #allocation8 [shape = 'u8[1024]{0}', space=vmem, size = 0x400, scoped, tag = 'output window, operand 1, single buffered']
    #allocation9 [shape = 's32[1]{0}', space=sflag, size = 0x4, scoped, tag = 'scoped memory for tpu_custom_call.1']
    %9 = vsyncpa [#allocation3], 0
    %10 = vsyncpa [#allocation6], 0
    %11 = vsyncpa [#allocation4], 0
    %12 = vsyncpa [#allocation9], 0
    // Predicated region
    $region2: #{tpu_custom_call.1} parent=1 // pred_check
      _
    $region3: #{tpu_custom_call.1} parent=1 // pred_check_branch
      %14 = sbr.rel (0) target = $region5
    $region4: #{tpu_custom_call.1} parent=1 // pred_region
      %s16 = ssub.s32 128, 128
      %17 = vsyncadd [#allocation3], %s16
      %s18 = sshll.u32 [#allocation2], 4
      %s19 = int_to_ptr.vmem [resolvable:$true] %s18
      %24 = dma.hbm_to_vmem [thread:$0]  %s0, 128, %s19, [#allocation3], 64, 64, 4
    $region5: #{tpu_custom_call.1} parent=1 // pred_fallthru
      _
    // Predicated region
    $region6: #{tpu_custom_call.1} parent=1 // pred_check
      _
    $region7: #{tpu_custom_call.1} parent=1 // pred_check_branch
      %26 = sbr.rel (0) target = $region9
    $region8: #{tpu_custom_call.1} parent=1 // pred_region
      %s28 = ssub.s32 1024, 1024
      %29 = vsyncadd [#allocation6], %s28
      %s30 = sshll.u32 [#allocation5], 4
      %s31 = int_to_ptr.vmem [resolvable:$true] %s30
      %36 = dma.hbm_to_vmem [thread:$0]  %s1, 1024, %s31, [#allocation6], 64, 64, 4
    $region9: #{tpu_custom_call.1} parent=1 // pred_fallthru
      _
    // Predicated region
    $region10: #{tpu_custom_call.1} parent=1 // pred_check
      _
    $region11: #{tpu_custom_call.1} parent=1 // pred_check_branch
      %38 = sbr.rel (0) target = $region13
    $region12: #{tpu_custom_call.1} parent=1 // pred_region
      %39 = dma.done [#allocation3], 128
    $region13: #{tpu_custom_call.1} parent=1 // pred_fallthru
      _
    // Predicated region
    $region14: #{tpu_custom_call.1} parent=1 // pred_check
      _
    $region15: #{tpu_custom_call.1} parent=1 // pred_check_branch
      %41 = sbr.rel (0) target = $region17
    $region16: #{tpu_custom_call.1} parent=1 // pred_region
      %42 = dma.done [#allocation6], 1024
    $region17: #{tpu_custom_call.1} parent=1 // pred_fallthru
      _
    %v44 = vld [vmem:[#allocation2] sm:$0xf]
    %v45 = vld [vmem:[#allocation2 + $0x4] sm:$0xf]
    %v46 = vld [vmem:[#allocation5] sm:$0xf]
    %v47 = vld [vmem:[#allocation5 + $0x4] sm:$0xf]
    %v48 = vld [vmem:[#allocation5 + $0x8] sm:$0xf]
    %v49 = vld [vmem:[#allocation5 + $0xc] sm:$0xf]
    %v50 = vld [vmem:[#allocation5 + $0x10] sm:$0xf]
    %v51 = vld [vmem:[#allocation5 + $0x14] sm:$0xf]
    %v52 = vld [vmem:[#allocation5 + $0x18] sm:$0xf]
    %v53 = vld [vmem:[#allocation5 + $0x1c] sm:$0xf]
    %v54 = vld [vmem:[#allocation5 + $0x20] sm:$0xf]
    %v55 = vld [vmem:[#allocation5 + $0x24] sm:$0xf]
    %v56 = vld [vmem:[#allocation5 + $0x28] sm:$0xf]
    %v57 = vld [vmem:[#allocation5 + $0x2c] sm:$0xf]
    %v58 = vld [vmem:[#allocation5 + $0x30] sm:$0xf]
    %v59 = vld [vmem:[#allocation5 + $0x34] sm:$0xf]
    %v60 = vld [vmem:[#allocation5 + $0x38] sm:$0xf]
    %v61 = vld [vmem:[#allocation5 + $0x3c] sm:$0xf]
    %v64 = vunpack.c.l.b16 %v44
    %v65 = vunpack.c.l.b16 %v45
    %v66 = vpack.c.b16 %v65, %v64
    %v84 = vunpack.c.l.b16 %v46
    %v85 = vunpack.c.l.b16 %v47
    %v86 = vunpack.c.l.b16 %v48
    %v87 = vunpack.c.l.b16 %v49
    %v88 = vunpack.c.l.b16 %v50
    %v89 = vunpack.c.l.b16 %v51
    %v90 = vunpack.c.l.b16 %v52
    %v91 = vunpack.c.l.b16 %v53
    %v92 = vunpack.c.l.b16 %v54
    %v93 = vunpack.c.l.b16 %v55
    %v94 = vunpack.c.l.b16 %v56
    %v95 = vunpack.c.l.b16 %v57
    %v96 = vunpack.c.l.b16 %v58
    %v97 = vunpack.c.l.b16 %v59
    %v98 = vunpack.c.l.b16 %v60
    %v99 = vunpack.c.l.b16 %v61
    %v100 = vpack.c.b16 %v85, %v84
    %v101 = vpack.c.b16 %v87, %v86
    %v102 = vpack.c.b16 %v89, %v88
    %v103 = vpack.c.b16 %v91, %v90
    %v104 = vpack.c.b16 %v93, %v92
    %v105 = vpack.c.b16 %v95, %v94
    %v106 = vpack.c.b16 %v97, %v96
    %v107 = vpack.c.b16 %v99, %v98
    %116 = vmatprep.subr.bf16.mxu0 0
    %117 = vmatpush1.bf16.msra.mxu0 %v100
    %118 = vmatprep.subr.bf16.mxu0 0
    %119 = vmatpush1.bf16.msra.mxu0 %v101
    %120 = vmatprep.subr.bf16.mxu0 0
    %121 = vmatpush1.bf16.msra.mxu0 %v102
    %122 = vmatprep.subr.bf16.mxu0 0
    %123 = vmatpush1.bf16.msra.mxu0 %v103
    %124 = vmatprep.subr.bf16.mxu0 0
    %125 = vmatpush1.bf16.msra.mxu0 %v104
    %126 = vmatprep.subr.bf16.mxu0 0
    %127 = vmatpush1.bf16.msra.mxu0 %v105
    %128 = vmatprep.subr.bf16.mxu0 0
    %129 = vmatpush1.bf16.msra.mxu0 %v106
    %130 = vmatprep.subr.bf16.mxu0 0
    %131 = vmatpush1.bf16.msra.mxu0 %v107
    %132 = vmatprep.subr.bf16.mxu0 0
    %133 = vmatpush1.bf16.msra.mxu0 0
    %134 = vmatprep.subr.bf16.mxu0 0
    %135 = vmatpush1.bf16.msra.mxu0 0
    %136 = vmatprep.subr.bf16.mxu0 0
    %137 = vmatpush1.bf16.msra.mxu0 0
    %138 = vmatprep.subr.bf16.mxu0 0
    %139 = vmatpush1.bf16.msra.mxu0 0
    %140 = vmatprep.subr.bf16.mxu0 0
    %141 = vmatpush1.bf16.msra.mxu0 0
    %142 = vmatprep.subr.bf16.mxu0 0
    %143 = vmatpush1.bf16.msra.mxu0 0
    %144 = vmatprep.subr.bf16.mxu0 0
    %145 = vmatpush1.bf16.msra.mxu0 0
    %146 = vmatprep.subr.bf16.mxu0 0
    %147 = vmatpush1.bf16.msra.mxu0 0
    %148 = vmatprep.mubr.bf16.mxu0 0
    %149 = vmatmul.mubr.bf16.gmra.mrb[0].mxu0 %v66
    %v150 = vpop.f32.mrb[0].mxu0
    %v151 = vadd.f32 0.0, %v150
    %v152 = vpop.f32.mrb[0].mxu0
    %v153 = vpop.f32.mrb[0].mxu0
    %v154 = vadd.f32 0.0, %v153
    %v155 = vpop.f32.mrb[0].mxu0
    %156 = vdwg.mxu0
    %v157 = vpack.c.bf16 %v154, %v151
    %v159 = vunpack.c.l.b16 %v157
    %v160 = vunpack.c.h.b16 %v157
    %v161 = vpack.c.b16 %v159, %v159
    %v162 = vpack.c.b16 %v160, %v160
    %165 = vst [vmem:[#allocation7] sm:$0xf] %v161
    %166 = vst [vmem:[#allocation7 + $0x4] sm:$0xf] %v162
    %v167 = vadd.f32 %v151, %v154
    %v168 = vrot.slane %v167, 4
    %v169 = vadd.f32 %v167, %v168
    %v170 = vrot.slane %v169, 2
    %v171 = vadd.f32 %v169, %v170
    %v172 = vrot.slane %v171, 1
    %v173 = vadd.f32 %v171, %v172
    %174 = vst [vmem:[#allocation8] sm:$0x1] %v173
    %v175 = vmul.f32 %v151, %v151
    %v176 = vmul.f32 %v154, %v154
    %v177 = vadd.f32 %v175, %v176
    %v178 = vrot.slane %v177, 4
    %v179 = vadd.f32 %v177, %v178
    %v180 = vrot.slane %v179, 2
    %v181 = vadd.f32 %v179, %v180
    %v182 = vrot.slane %v181, 1
    %v183 = vadd.f32 %v181, %v182
    %184 = vst [vmem:[#allocation8 + $0x1] sm:$0x1] %v183
    // Predicated region
    $region18: #{tpu_custom_call.1} parent=1 // pred_check
      _
    $region19: #{tpu_custom_call.1} parent=1 // pred_check_branch
      %186 = sbr.rel (0) target = $region21
    $region20: #{tpu_custom_call.1} parent=1 // pred_region
      %s188 = ssub.s32 128, 128
      %189 = vsyncadd [#allocation4], %s188
      %s190 = sshll.u32 [#allocation7], 4
      %s191 = int_to_ptr.vmem [resolvable:$true] %s190
      %196 = dma.vmem_to_hbm [thread:$0]  %s191, 128, %s2, [#allocation4], 64, 64, 4
    $region21: #{tpu_custom_call.1} parent=1 // pred_fallthru
      _
    // Predicated region
    $region22: #{tpu_custom_call.1} parent=1 // pred_check
      _
    $region23: #{tpu_custom_call.1} parent=1 // pred_check_branch
      %198 = sbr.rel (0) target = $region25
    $region24: #{tpu_custom_call.1} parent=1 // pred_region
      %s200 = ssub.s32 32, 32
      %201 = vsyncadd [#allocation9], %s200
      %s203 = sshll.u32 [#allocation8], 4
      %s204 = int_to_ptr.vmem [resolvable:$true] %s203
      %206 = dma.vmem_to_hbm [thread:$0]  %s204, 32, %s3, [#allocation9]
    $region25: #{tpu_custom_call.1} parent=1 // pred_fallthru
      _
    // Predicated region
    $region26: #{tpu_custom_call.1} parent=1 // pred_check
      _
    $region27: #{tpu_custom_call.1} parent=1 // pred_check_branch
      %208 = sbr.rel (0) target = $region29
    $region28: #{tpu_custom_call.1} parent=1 // pred_region
      %209 = dma.done [#allocation4], 128
    $region29: #{tpu_custom_call.1} parent=1 // pred_fallthru
      _
    // Predicated region
    $region30: #{tpu_custom_call.1} parent=1 // pred_check
      _
    $region31: #{tpu_custom_call.1} parent=1 // pred_check_branch
      %211 = sbr.rel (0) target = $region33
    $region32: #{tpu_custom_call.1} parent=1 // pred_region
      %212 = dma.done [#allocation9], 32
    $region33: #{tpu_custom_call.1} parent=1 // pred_fallthru
      _
    %213 = vsyncpa [#allocation3], 1
    %214 = vsyncpa [#allocation6], 1
    %215 = vsyncpa [#allocation4], 1
    %216 = vsyncpa [#allocation9], 1

</llo_original>
